<compile_context>
chip_gen: v6e
topology: v6e:2x2x1
jax: 0.10.0
libtpu: 0.0.40
codegen_flags: <defaults>
</compile_context>

<pallas_src>
import math

import jax
import jax.numpy as jnp
from jax.experimental import pallas as pl
from jax.experimental.pallas import tpu as pltpu


def _broadcast_row_kernel(row_ref, out_ref):
    # row_ref: (1, L) resident, already-exp'ed scale row.
    # out_ref: (tM, L) output block.
    # Pure broadcast-store: no exp, no cast -- step latency is output DMA only.
    out_ref[...] = jnp.broadcast_to(row_ref[...], out_ref.shape)


def _pick_lane_width(total, d, cap=8192):
    """Largest multiple of d dividing total, preferring multiples of 128.

    d always divides total (it is x's last dim), so lane >= d.  If no
    128-multiple divides total, stores degrade to masked vst.msk -- a layout
    property of the input shape (perf only, never a correctness issue).
    """
    best = d
    best_dense = None
    l = d
    limit = min(total, cap)
    while l <= limit:
        if total % l == 0:
            best = l
            if l % 128 == 0:
                best_dense = l
        l += d
    return best_dense if best_dense is not None else best


def _pick_row_tile(rows, lane, itemsize, target_bytes=4 << 20):
    """Fixed multiple-of-8 row tile of ~target_bytes; grid uses pl.cdiv."""
    if rows <= 8:
        return rows  # single tiny full-extent block
    # ~4 MiB per block: the ~0.35 us per-grid-step overhead drops below ~10%
    # of the pure-writeback time on v5e/v6e/v7x (vs 25-45% at 1 MiB blocks).
    tm = max(8, (target_bytes // max(1, lane * itemsize)) // 8 * 8)
    # Cap so the grid has at least 2 (roughly balanced) steps: the "parallel"
    # axis then shards across both v7x TensorCores instead of leaving one idle
    # on small/medium activations.
    tm_split_cap = 8 * ((rows + 15) // 16)
    return min(tm, tm_split_cap)


def diag_gaussian_forward(x, logstd_bias, materialize_scale=True):
    """Returns (loc, scale) of the FixedNormal produced by DiagGaussian.forward.

    scale is float32 (PyTorch: torch.zeros(x.size()) + float32 bias stays
    float32), broadcast to x.shape when materialize_scale=True.  With
    materialize_scale=False the broadcastable (1, ..., 1, D) scale row is
    returned instead, skipping 100% of the redundant HBM write traffic --
    prefer that whenever the consumer (log_prob / sample / entropy) can
    broadcast it itself.
    """
    d = logstd_bias.shape[-1]
    assert x.shape[-1] == d, "last dim of x must match logstd dim"

    scale_dtype = jnp.float32  # matches torch.zeros() default-dtype promotion
    # exp() hoisted out of the kernel: O(D) EUP work, done once in the wrapper.
    scale_vec = jnp.exp(logstd_bias.astype(scale_dtype))

    if not materialize_scale:
        return x, scale_vec.reshape((1,) * (x.ndim - 1) + (d,))

    total = math.prod(x.shape)
    lane = _pick_lane_width(total, d)
    rows = total // lane
    itemsize = jnp.dtype(scale_dtype).itemsize
    tm = _pick_row_tile(rows, lane, itemsize)
    grid = (pl.cdiv(rows, tm),)

    # Resident (1, lane) scale row: already exp'ed, already in the output dtype.
    scale_row = jnp.tile(scale_vec.reshape(1, d), (1, lane // d))

    # Explicit VMEM budget: 2x-buffered output block + 2x-buffered input row
    # + slack, floored at 16 MiB and clamped to the physical per-core VMEM.
    tile_bytes = tm * lane * itemsize
    row_bytes = lane * itemsize
    vmem_cap = 64 << 20  # smallest physical per-TC VMEM across generations (v7x)
    try:
        vmem_cap = int(pltpu.get_tpu_info().vmem_capacity_bytes)
    except Exception:
        pass
    vmem_limit = int(min(vmem_cap,
                         max(16 << 20,
                             2 * tile_bytes + 2 * row_bytes + (8 << 20))))

    scale_flat = pl.pallas_call(
        _broadcast_row_kernel,
        out_shape=jax.ShapeDtypeStruct((rows, lane), scale_dtype),
        grid_spec=pltpu.PrefetchScalarGridSpec(
            num_scalar_prefetch=0,
            grid=grid,
            in_specs=[pl.BlockSpec((1, lane), lambda i: (0, 0))],
            out_specs=pl.BlockSpec((tm, lane), lambda i: (i, 0)),
        ),
        compiler_params=pltpu.CompilerParams(
            dimension_semantics=("parallel",),
            vmem_limit_bytes=vmem_limit),
    )(scale_row)

    scale = scale_flat.reshape(x.shape)  # contiguous row-major: free reshape
    # loc is x by definition: no kernel read of x, no loc copy DMA.
    return x, scale


class DiagGaussian:
    """JAX/Pallas port of the PyTorch DiagGaussian module."""

    def __init__(self, dim):
        # nn.Parameter(torch.zeros(dim)) -> deterministic zero init (float32).
        self.logstd_bias = jnp.zeros((dim,), dtype=jnp.float32)

    def __call__(self, x, materialize_scale=True):
        # TODO(synk): FixedNormal (torch.distributions.Normal wrapper) has no
        # Pallas equivalent; we return its (loc, scale) parameters instead.
        return diag_gaussian_forward(x, self.logstd_bias, materialize_scale)


def _reference(x, logstd_bias):
    logstd = jnp.zeros(x.shape, jnp.float32) + logstd_bias.reshape(
        (1,) * (x.ndim - 1) + (-1,)).astype(jnp.float32)
    return x, jnp.exp(logstd)


if __name__ == "__main__":
    key = jax.random.PRNGKey(0)
    kx, kb = jax.random.split(key)

    # Small shape implied by the module: (batch, seq, action_dim).
    B, T, D = 2, 8, 32
    x = jax.random.normal(kx, (B, T, D), dtype=jnp.float32)

    module = DiagGaussian(D)
    # Nonzero (trained-like) bias so exp + broadcast are actually exercised.
    module.logstd_bias = 0.1 * jax.random.normal(kb, (D,), dtype=jnp.float32)

    loc, scale = module(x)
    jax.block_until_ready((loc, scale))

    ref_loc, ref_scale = _reference(x, module.logstd_bias)
    assert loc.dtype == x.dtype and jnp.allclose(loc, ref_loc), "loc mismatch"
    assert scale.dtype == jnp.float32, "scale dtype mismatch"
    assert jnp.allclose(scale, ref_scale, rtol=1e-6, atol=1e-6), "scale mismatch"

    # Second check: exercises the multi-block grid with a ragged last block
    # (rows=24, tm=16, grid=2) while staying small (~0.6 MB).
    D2 = 128
    x2 = jax.random.normal(kx, (9, 136, D2), dtype=jnp.float32)
    module2 = DiagGaussian(D2)
    module2.logstd_bias = 0.05 * jax.random.normal(kb, (D2,), dtype=jnp.float32)
    loc2, scale2 = module2(x2)
    jax.block_until_ready((loc2, scale2))
    _, ref_scale2 = _reference(x2, module2.logstd_bias)
    assert jnp.allclose(loc2, x2), "loc2 mismatch"
    assert jnp.allclose(scale2, ref_scale2, rtol=1e-6, atol=1e-6), "scale2 mismatch"

    print("KERNEL_OK")
</pallas_src>

<mosaic_0001>
module attributes {stable_mosaic.version = 11 : i64} {
  func.func @_broadcast_row_kernel(%arg0: i32, %arg1: memref<1x512xf32, #tpu.memory_space<vmem>>, %arg2: memref<1x512xf32, #tpu.memory_space<vmem>>) attributes {dimension_semantics = [#tpu.dimension_semantics<parallel>], iteration_bounds = array<i64: 1>, scalar_prefetch = 0 : i64, scratch_operands = 0 : i64, tpu.core_type = #tpu.core_type<tc>, window_params = [{pipeline_mode = #tpu.pipeline_mode<synchronous>, transform_indices = @transform_0, window_bounds = array<i64: 1, 512>}, {transform_indices = @transform_1, window_bounds = array<i64: 1, 512>}]} {
    %c0 = arith.constant 0 : index
    %c0_0 = arith.constant 0 : index
    %0 = vector.load %arg1[%c0, %c0_0] : memref<1x512xf32, #tpu.memory_space<vmem>>, vector<1x512xf32>
    %c0_1 = arith.constant 0 : index
    %c0_2 = arith.constant 0 : index
    %1 = vector.load %arg2[%c0_1, %c0_2] : memref<1x512xf32, #tpu.memory_space<vmem>>, vector<1x512xf32>
    tpu.vector_store %arg2[%c0_1, %c0_2], %0 {strides = array<i32>} : memref<1x512xf32, #tpu.memory_space<vmem>>, vector<1x512xf32>,
    return
  }
  func.func @transform_0(%arg0: i32) -> (i32, i32) {
    %c0_i32 = arith.constant 0 : i32
    %c0_i32_0 = arith.constant 0 : i32
    %c0_i32_1 = arith.constant 0 : i32
    return %c0_i32, %c0_i32_0 : i32, i32
  }
  func.func @transform_1(%arg0: i32) -> (i32, i32) {
    %c0_i32 = arith.constant 0 : i32
    %c0_i32_0 = arith.constant 0 : i32
    return %arg0, %c0_i32 : i32, i32
  }
}

</mosaic_0001>

<llo_original>
// kernel: tpu_custom_call.1
$region0: #{tpu_custom_call.1}
  #allocation0 [shape = 'u32[]', space=smem, size = 0x4, offset = 0x4, fixed_abs, tag = 'smem constant byte address 0x4 - core index']
  #allocation1 [shape = 'u32[144,128]{1,0:T(1,128)}', space=vmem, size = 0x12000, scoped, tag = 'internal scratch']
  %s0 = inlined_call_operand.hbm [shape: f32[1,512], index: 0, kind: input, shape index: {}]
  %s1 = inlined_call_operand.hbm [shape: f32[1,512], index: 1, kind: output, shape index: {}]
  %s2 = sld [smem:[#allocation0]]
  $region18: #{tpu_custom_call.1} parent=0
    _
  %s4 = ssub.s32 1, %s2
  %s5 = scalar_select 0, %s4, %s2
  $region1: #{tpu_custom_call.1} parent=0
    #allocation2 [shape = 'u8[2048]{0}', space=vmem, size = 0x800, scoped, tag = 'input window, operand 0, single buffered']
    #allocation3 [shape = 's32[1]{0}', space=sflag, size = 0x4, scoped, tag = 'scoped memory for tpu_custom_call.1']
    #allocation4 [shape = 's32[1]{0}', space=sflag, size = 0x4, scoped, tag = 'scoped memory for tpu_custom_call.1']
    #allocation5 [shape = 'u8[2048]{0}', space=vmem, size = 0x800, scoped, tag = 'output window, operand 0, single buffered']
    %6 = vsyncpa [#allocation3], 0
    %7 = vsyncpa [#allocation4], 0
    // Predicated region
    $region2: #{tpu_custom_call.1} parent=1 // pred_check
      _
    $region3: #{tpu_custom_call.1} parent=1 // pred_check_branch
      %9 = sbr.rel (0) target = $region5
    $region4: #{tpu_custom_call.1} parent=1 // pred_region
      %s11 = ssub.s32 64, 64
      %12 = vsyncadd [#allocation3], %s11
      %s14 = sshll.u32 [#allocation2], 4
      %s15 = int_to_ptr.vmem [resolvable:$true] %s14
      %17 = dma.hbm_to_vmem [thread:$0]  %s0, 64, %s15, [#allocation3]
    $region5: #{tpu_custom_call.1} parent=1 // pred_fallthru
      _
    // Predicated region
    $region6: #{tpu_custom_call.1} parent=1 // pred_check
      _
    $region7: #{tpu_custom_call.1} parent=1 // pred_check_branch
      %19 = sbr.rel (0) target = $region9
    $region8: #{tpu_custom_call.1} parent=1 // pred_region
      %20 = dma.done [#allocation3], 64
    $region9: #{tpu_custom_call.1} parent=1 // pred_fallthru
      _
    %v21 = vld [vmem:[#allocation2] sm:$0xf]
    %v22 = vlaneseq
    %vm23 = vcmp.ge.s32.totalorder %v22, 0
    %vm24 = vcmp.lt.s32.totalorder %v22, 512
    %vm25 = vmand %vm23, %vm24
    %26 = vst.msk [vmem:[#allocation5] sm:$0xf] %vm25, %v21
    // Predicated region
    $region10: #{tpu_custom_call.1} parent=1 // pred_check
      _
    $region11: #{tpu_custom_call.1} parent=1 // pred_check_branch
      %28 = sbr.rel (0) target = $region13
    $region12: #{tpu_custom_call.1} parent=1 // pred_region
      %s30 = ssub.s32 64, 64
      %31 = vsyncadd [#allocation4], %s30
      %s33 = sshll.u32 [#allocation5], 4
      %s34 = int_to_ptr.vmem [resolvable:$true] %s33
      %36 = dma.vmem_to_hbm [thread:$0]  %s34, 64, %s1, [#allocation4]
    $region13: #{tpu_custom_call.1} parent=1 // pred_fallthru
      _
    // Predicated region
    $region14: #{tpu_custom_call.1} parent=1 // pred_check
      _
    $region15: #{tpu_custom_call.1} parent=1 // pred_check_branch
      %38 = sbr.rel (0) target = $region17
    $region16: #{tpu_custom_call.1} parent=1 // pred_region
      %39 = dma.done [#allocation4], 64
    $region17: #{tpu_custom_call.1} parent=1 // pred_fallthru
      _
    %40 = vsyncpa [#allocation3], 1
    %41 = vsyncpa [#allocation4], 1

</llo_original>
